<compile_context>
chip_gen: v7x
topology: tpu7x:2x2x1
jax: 0.10.0
libtpu: 0.0.40
codegen_flags: <defaults>
</compile_context>

<pallas_src>
import functools

import jax
import jax.numpy as jnp
from jax import lax
from jax.experimental import pallas as pl
from jax.experimental.pallas import tpu as pltpu


def _round_up(x, m):
    return ((x + m - 1) // m) * m


def _chip_config(n_pad):
    """Generation-aware (vmem_limit_bytes, tile) choice."""
    try:
        vmem_cap = int(getattr(pltpu.get_tpu_info(), "vmem_capacity_bytes",
                               128 * 1024 * 1024))
    except Exception:
        vmem_cap = 128 * 1024 * 1024
    if vmem_cap <= 64 * 1024 * 1024:          # v7x-class TensorCore (64 MiB VMEM)
        return 40 * 1024 * 1024, 128
    # v5e / v6e: 128 MiB physical VMEM - use headroom for larger row tiles.
    tile = 256 if n_pad % 256 == 0 else 128
    return 96 * 1024 * 1024, tile


def _block_diag_attn(attn):
    """(M, H, D) attention vectors -> (M, H*D, H) block-diagonal matrices so
    feat @ mat yields the per-head logits for ALL heads with one matmul."""
    m, h, d = attn.shape
    eye = jnp.eye(h, dtype=attn.dtype)
    return (attn[:, :, :, None] * eye[:, None, :]).reshape(m, h * d, h)


# -----------------------------------------------------------------------------
# Prologue: per-metapath projection feat = h @ W, source logits el, dest logits er
# (computed ONCE per metapath instead of once per destination-row tile)
# -----------------------------------------------------------------------------
def _project_kernel(h_ref, w_ref, al_ref, ar_ref, feat_ref, el_ref, er_ref):
    f = jnp.dot(h_ref[...].astype(jnp.bfloat16), w_ref[0].astype(jnp.bfloat16),
                preferred_element_type=jnp.float32)                  # (T, HD)
    feat_ref[0] = f.astype(jnp.bfloat16)
    # Source logits laid out (H, T): lane-dense store, and the main kernel can
    # slice per-head rows without an in-kernel transpose.
    el_ref[0] = lax.dot_general(al_ref[0], f, (((0,), (1,)), ((), ())),
                                preferred_element_type=jnp.float32)  # (H, T)
    er_ref[0] = jnp.dot(f, ar_ref[0],
                        preferred_element_type=jnp.float32)          # (T, H)


def _project(h, W, al_mat, ar_mat, tile, vmem_limit):
    n_pad, fin = h.shape
    m_paths, _, hd = W.shape
    heads = al_mat.shape[2]
    return pl.pallas_call(
        _project_kernel,
        out_shape=(
            jax.ShapeDtypeStruct((m_paths, n_pad, hd), jnp.bfloat16),   # feat
            jax.ShapeDtypeStruct((m_paths, heads, n_pad), jnp.float32),  # el
            jax.ShapeDtypeStruct((m_paths, n_pad, heads), jnp.float32),  # er
        ),
        grid_spec=pltpu.PrefetchScalarGridSpec(
            num_scalar_prefetch=0,
            grid=(m_paths, n_pad // tile),
            in_specs=[
                pl.BlockSpec((tile, fin), lambda m, t: (t, 0)),        # h rows
                pl.BlockSpec((1, fin, hd), lambda m, t: (m, 0, 0)),    # fc weight
                pl.BlockSpec((1, hd, heads), lambda m, t: (m, 0, 0)),  # attn_l (bd)
                pl.BlockSpec((1, hd, heads), lambda m, t: (m, 0, 0)),  # attn_r (bd)
            ],
            out_specs=[
                pl.BlockSpec((1, tile, hd), lambda m, t: (m, t, 0)),
                pl.BlockSpec((1, heads, tile), lambda m, t: (m, 0, t)),
                pl.BlockSpec((1, tile, heads), lambda m, t: (m, t, 0)),
            ],
        ),
        compiler_params=pltpu.CompilerParams(
            dimension_semantics=("parallel", "parallel"),
            vmem_limit_bytes=vmem_limit,
        ),
    )(h, W, al_mat, ar_mat)


# -----------------------------------------------------------------------------
# Main fused HANLayer kernel: GAT bank (online softmax over source tiles)
# + ELU + SemanticAttention
# -----------------------------------------------------------------------------
def _han_layer_kernel(heads, d, adj_ref, feat_ref, el_ref, er_ref, b_ref,
                      w1_ref, b1_ref, w2_ref, out_ref,
                      z_buf, s_buf, m_scr, l_scr, acc_scr):
    mp = pl.program_id(1)
    u = pl.program_id(2)
    last_u = u == pl.num_programs(2) - 1

    @pl.when(u == 0)
    def _():
        m_scr[...] = jnp.full_like(m_scr, -1e30)
        l_scr[...] = jnp.zeros_like(l_scr)
        acc_scr[...] = jnp.zeros_like(acc_scr)

    mask = adj_ref[0].astype(jnp.float32)            # (Tv, Tu) 0/1
    feat = feat_ref[0]                               # (Tu, HD) bf16 sources
    el = el_ref[0]                                   # (H, Tu)  source logits
    er = er_ref[0]                                   # (Tv, H)  destination logits

    for hi in range(heads):                          # static unroll (H small)
        sc = er[:, hi:hi + 1] + el[hi:hi + 1, :]     # (Tv, Tu): er[v] + el[u]
        sc = jnp.where(sc >= 0.0, sc, 0.2 * sc)      # leaky_relu(0.2)
        m_old = m_scr[hi]                            # (Tv, 1)
        m_new = jnp.maximum(m_old, jnp.max(sc, axis=1, keepdims=True))
        corr = jnp.exp(m_old - m_new)
        p = jnp.exp(sc - m_new) * mask               # non-edges excluded here
        l_scr[hi] = corr * l_scr[hi] + jnp.sum(p, axis=1, keepdims=True)
        acc_scr[hi] = corr * acc_scr[hi] + jnp.dot(
            p.astype(jnp.bfloat16), feat[:, hi * d:(hi + 1) * d],
            preferred_element_type=jnp.float32)
        m_scr[hi] = m_new

    # Finish GAT for this metapath (normalize, bias, ELU) + semantic score.
    @pl.when(last_u)
    def _():
        parts = [acc_scr[hi] * pl.reciprocal(l_scr[hi], approx=False)
                 for hi in range(heads)]
        rst = jnp.concatenate(parts, axis=1) + b_ref[0]          # (Tv, HD)
        rst = jnp.where(rst > 0.0, rst,
                        jnp.exp(jnp.minimum(rst, 0.0)) - 1.0)    # ELU
        z_buf[mp] = rst                                          # z stays in VMEM
        proj = jnp.tanh(jnp.dot(rst.astype(jnp.bfloat16),
                                w1_ref[...].astype(jnp.bfloat16),
                                preferred_element_type=jnp.float32)
                        + b1_ref[...])
        s_buf[mp] = jnp.sum(proj * w2_ref[...], axis=1, keepdims=True)  # (Tv, 1)

    # Finalize: softmax over metapaths (per node), beta-weighted sum.
    @pl.when(jnp.logical_and(last_u, mp == pl.num_programs(1) - 1))
    def _():
        s = s_buf[...]                                           # (M, Tv, 1)
        smax = jnp.max(s, axis=0, keepdims=True)
        e = jnp.exp(s - smax)
        beta = e * pl.reciprocal(jnp.sum(e, axis=0, keepdims=True), approx=False)
        out_ref[...] = jnp.sum(beta * z_buf[...], axis=0)        # (Tv, HD)


def han_layer(h, adj_i8, layer, tile, vmem_limit):
    """h: (N_pad, Fin) f32, adj_i8: (M, N_pad, N_pad) int8 -> (N_pad, H*D) f32."""
    n_pad, fin = h.shape
    W, attn_l, attn_r = layer["W"], layer["attn_l"], layer["attn_r"]
    bias = layer["bias"]
    sem_W1, sem_b1, sem_W2 = layer["sem_W1"], layer["sem_b1"], layer["sem_W2"]

    m_paths, _, hd = W.shape
    heads = attn_l.shape[1]
    d = hd // heads
    hs = sem_W1.shape[1]
    n_vt = n_pad // tile
    n_ut = n_pad // tile

    al_mat = _block_diag_attn(attn_l)
    ar_mat = _block_diag_attn(attn_r)
    feat, el, er = _project(h, W, al_mat, ar_mat, tile, vmem_limit)

    cost = pl.CostEstimate(
        flops=int(2 * m_paths * (n_pad * n_pad * hd + n_pad * hd * hs)),
        transcendentals=int(m_paths * (heads * n_pad * n_pad + n_pad * (hs + hd))),
        bytes_accessed=int(m_paths * n_pad * n_pad                # int8 adjacency
                           + n_vt * m_paths * n_pad * hd * 2      # bf16 feat stream
                           + m_paths * n_pad * heads * 8          # el + er
                           + n_pad * hd * 4),
    )

    kernel = functools.partial(_han_layer_kernel, heads, d)

    return pl.pallas_call(
        kernel,
        out_shape=jax.ShapeDtypeStruct((n_pad, hd), jnp.float32),
        grid_spec=pltpu.PrefetchScalarGridSpec(
            num_scalar_prefetch=0,
            grid=(n_vt, m_paths, n_ut),           # (dest tile, metapath, src tile)
            in_specs=[
                pl.BlockSpec((1, tile, tile), lambda v, m, u: (m, v, u)),   # adj int8
                pl.BlockSpec((1, tile, hd), lambda v, m, u: (m, u, 0)),     # feat bf16
                pl.BlockSpec((1, heads, tile), lambda v, m, u: (m, 0, u)),  # el
                pl.BlockSpec((1, tile, heads), lambda v, m, u: (m, v, 0)),  # er
                pl.BlockSpec((1, 1, hd), lambda v, m, u: (m, 0, 0)),        # GAT bias
                pl.BlockSpec((hd, hs), lambda v, m, u: (0, 0)),             # sem W1
                pl.BlockSpec((1, hs), lambda v, m, u: (0, 0)),              # sem b1
                pl.BlockSpec((1, hs), lambda v, m, u: (0, 0)),              # sem w2
            ],
            out_specs=pl.BlockSpec((tile, hd), lambda v, m, u: (v, 0)),
            scratch_shapes=[
                pltpu.VMEM((m_paths, tile, hd), jnp.float32),  # z per metapath
                pltpu.VMEM((m_paths, tile, 1), jnp.float32),   # semantic scores
                pltpu.VMEM((heads, tile, 1), jnp.float32),     # running max
                pltpu.VMEM((heads, tile, 1), jnp.float32),     # running denominator
                pltpu.VMEM((heads, tile, d), jnp.float32),     # running weighted sum
            ],
        ),
        compiler_params=pltpu.CompilerParams(
            dimension_semantics=("parallel", "arbitrary", "arbitrary"),
            vmem_limit_bytes=vmem_limit,
        ),
        cost_estimate=cost,
    )(adj_i8, feat, el, er, bias, sem_W1, sem_b1, sem_W2)


# -----------------------------------------------------------------------------
# Final predict Linear (row-tiled pipeline)
# -----------------------------------------------------------------------------
def _linear_kernel(x_ref, w_ref, b_ref, o_ref):
    o_ref[...] = (jnp.dot(x_ref[...], w_ref[...],
                          preferred_element_type=jnp.float32) + b_ref[...])


def linear(x, W, b, tile, vmem_limit):
    n_pad, fin = x.shape
    o = W.shape[1]
    # TODO(synk): out_size < 128 lanes -> masked writeback stores; pad the lane
    # dim if this projection ever becomes significant.
    return pl.pallas_call(
        _linear_kernel,
        out_shape=jax.ShapeDtypeStruct((n_pad, o), jnp.float32),
        grid_spec=pltpu.PrefetchScalarGridSpec(
            num_scalar_prefetch=0,
            grid=(n_pad // tile,),
            in_specs=[
                pl.BlockSpec((tile, fin), lambda i: (i, 0)),
                pl.BlockSpec((fin, o), lambda i: (0, 0)),
                pl.BlockSpec((1, o), lambda i: (0, 0)),
            ],
            out_specs=pl.BlockSpec((tile, o), lambda i: (i, 0)),
        ),
        compiler_params=pltpu.CompilerParams(
            dimension_semantics=("parallel",),
            vmem_limit_bytes=vmem_limit,
        ),
    )(x, W, b)


# -----------------------------------------------------------------------------
# Full HAN forward
# -----------------------------------------------------------------------------
def han_forward(params, adj, h):
    """adj: (M, N, N) {0,1} int8, h: (N, Fin) f32 -> (N, out_size) f32."""
    n = h.shape[0]
    n_pad = _round_up(n, 128)
    vmem_limit, tile = _chip_config(n_pad)

    # Pad node count to a multiple of 128 (lane/sublane friendly, big DMAs).
    # Padded rows get a self-loop so every destination has >= 1 in-neighbor.
    if n_pad != n:
        h = jnp.pad(h, ((0, n_pad - n), (0, 0)))
        adj = jnp.pad(adj, ((0, 0), (0, n_pad - n), (0, n_pad - n)))
        pad_idx = jnp.arange(n, n_pad)
        adj = adj.at[:, pad_idx, pad_idx].set(1)
    adj_i8 = adj.astype(jnp.int8)

    for layer in params["layers"]:
        h = han_layer(h, adj_i8, layer, tile, vmem_limit)
    out = linear(h, params["predict_W"], params["predict_b"], tile, vmem_limit)
    return out[:n]


# -----------------------------------------------------------------------------
# Deterministic parameter construction (shapes match HAN.__init__)
# -----------------------------------------------------------------------------
def init_han_params(key, num_meta_paths, in_size, hidden_size, out_size,
                    num_heads, sem_hidden=128):
    params = {"layers": []}
    fin = in_size
    for heads in num_heads:
        key, k1, k2, k3, k4, k5 = jax.random.split(key, 6)
        hd = heads * hidden_size
        params["layers"].append({
            # GATConv (per meta-path): fc weight (no bias), attn_l, attn_r, bias
            "W": 0.1 * jax.random.normal(k1, (num_meta_paths, fin, hd), jnp.float32),
            "attn_l": 0.1 * jax.random.normal(k2, (num_meta_paths, heads, hidden_size), jnp.float32),
            "attn_r": 0.1 * jax.random.normal(k3, (num_meta_paths, heads, hidden_size), jnp.float32),
            "bias": jnp.zeros((num_meta_paths, 1, hd), jnp.float32),
            # SemanticAttention.project = Linear(hd, sem_hidden) -> Tanh -> Linear(sem_hidden, 1, bias=False)
            "sem_W1": 0.1 * jax.random.normal(k4, (hd, sem_hidden), jnp.float32),
            "sem_b1": jnp.zeros((1, sem_hidden), jnp.float32),
            "sem_W2": 0.1 * jax.random.normal(k5, (1, sem_hidden), jnp.float32),
        })
        fin = hd
    key, kp1, kp2 = jax.random.split(key, 3)
    params["predict_W"] = 0.1 * jax.random.normal(kp1, (fin, out_size), jnp.float32)
    params["predict_b"] = 0.1 * jax.random.normal(kp2, (1, out_size), jnp.float32)
    return params


# -----------------------------------------------------------------------------
if __name__ == "__main__":
    # Small HAN config: 3 meta-paths, 300 nodes (non-multiple of 128 to exercise
    # padding + the multi-tile (dest, metapath, source) grid), 2 layers, 2 heads.
    N = 300
    NUM_META_PATHS = 3
    IN_SIZE = 8
    HIDDEN_SIZE = 8
    OUT_SIZE = 4
    NUM_HEADS = (2, 2)

    key = jax.random.PRNGKey(0)
    key, kh, ka, kp = jax.random.split(key, 4)

    # Node features.
    h = jax.random.normal(kh, (N, IN_SIZE), jnp.float32)

    # Dense adjacency masks per meta-path (+ self-loops), stored as int8.
    adj = jax.random.uniform(ka, (NUM_META_PATHS, N, N)) < 0.05
    adj = jnp.logical_or(adj, jnp.eye(N, dtype=bool)[None, :, :]).astype(jnp.int8)

    params = init_han_params(kp, NUM_META_PATHS, IN_SIZE, HIDDEN_SIZE,
                             OUT_SIZE, NUM_HEADS)

    out = han_forward(params, adj, h)
    out = jax.block_until_ready(out)
    assert out.shape == (N, OUT_SIZE)
    assert bool(jnp.all(jnp.isfinite(out)))
    print("KERNEL_OK")
</pallas_src>

<mosaic_0001>
module attributes {stable_mosaic.version = 11 : i64} {
  func.func @_project_kernel(%arg0: i32, %arg1: i32, %arg2: memref<128x8xf32, #tpu.memory_space<vmem>>, %arg3: memref<1x8x16xf32, #tpu.memory_space<vmem>>, %arg4: memref<1x16x2xf32, #tpu.memory_space<vmem>>, %arg5: memref<1x16x2xf32, #tpu.memory_space<vmem>>, %arg6: memref<1x128x16xbf16, #tpu.memory_space<vmem>>, %arg7: memref<1x2x128xf32, #tpu.memory_space<vmem>>, %arg8: memref<1x128x2xf32, #tpu.memory_space<vmem>>) attributes {dimension_semantics = [#tpu.dimension_semantics<parallel>, #tpu.dimension_semantics<parallel>], iteration_bounds = array<i64: 3, 3>, scalar_prefetch = 0 : i64, scratch_operands = 0 : i64, tpu.core_type = #tpu.core_type<tc>, window_params = [{transform_indices = @transform_0, window_bounds = array<i64: 128, 8>}, {transform_indices = @transform_1, window_bounds = array<i64: 1, 8, 16>}, {transform_indices = @transform_2, window_bounds = array<i64: 1, 16, 2>}, {transform_indices = @transform_3, window_bounds = array<i64: 1, 16, 2>}, {transform_indices = @transform_4, window_bounds = array<i64: 1, 128, 16>}, {transform_indices = @transform_5, window_bounds = array<i64: 1, 2, 128>}, {transform_indices = @transform_6, window_bounds = array<i64: 1, 128, 2>}]} {
    %c0 = arith.constant 0 : index
    %c0_0 = arith.constant 0 : index
    %0 = vector.load %arg2[%c0, %c0_0] : memref<128x8xf32, #tpu.memory_space<vmem>>, vector<128x8xf32>
    %1 = arith.truncf %0 : vector<128x8xf32> to vector<128x8xbf16>
    %c0_1 = arith.constant 0 : index
    %c0_2 = arith.constant 0 : index
    %c0_3 = arith.constant 0 : index
    %2 = vector.load %arg3[%c0_1, %c0_2, %c0_3] : memref<1x8x16xf32, #tpu.memory_space<vmem>>, vector<1x8x16xf32>
    %3 = vector.shape_cast %2 : vector<1x8x16xf32> to vector<8x16xf32>
    %4 = arith.truncf %3 : vector<8x16xf32> to vector<8x16xbf16>
    %cst = arith.constant dense<0.000000e+00> : vector<128x16xf32>
    %5 = tpu.matmul %1, %4, %cst {dimension_numbers = #tpu.dot_dimension_numbers<[1], [0], [0], [1], [0, 0, 1, 1], [], []>} : vector<128x8xbf16>, vector<8x16xbf16>, vector<128x16xf32> -> vector<128x16xf32>
    %6 = arith.truncf %5 : vector<128x16xf32> to vector<128x16xbf16>
    %c0_4 = arith.constant 0 : index
    %c0_5 = arith.constant 0 : index
    %c0_6 = arith.constant 0 : index
    %7 = vector.load %arg6[%c0_4, %c0_5, %c0_6] : memref<1x128x16xbf16, #tpu.memory_space<vmem>>, vector<1x128x16xbf16>
    %8 = vector.shape_cast %7 : vector<1x128x16xbf16> to vector<128x16xbf16>
    %9 = vector.shape_cast %6 : vector<128x16xbf16> to vector<1x128x16xbf16>
    tpu.vector_store %arg6[%c0_4, %c0_5, %c0_6], %9 {strides = array<i32>} : memref<1x128x16xbf16, #tpu.memory_space<vmem>>, vector<1x128x16xbf16>,
    %c0_7 = arith.constant 0 : index
    %c0_8 = arith.constant 0 : index
    %c0_9 = arith.constant 0 : index
    %10 = vector.load %arg4[%c0_7, %c0_8, %c0_9] : memref<1x16x2xf32, #tpu.memory_space<vmem>>, vector<1x16x2xf32>
    %11 = vector.shape_cast %10 : vector<1x16x2xf32> to vector<16x2xf32>
    %cst_10 = arith.constant dense<0.000000e+00> : vector<2x128xf32>
    %12 = tpu.matmul %11, %5, %cst_10 {dimension_numbers = #tpu.dot_dimension_numbers<[0], [1], [1], [0], [0, 1, 1, 0], [], []>} : vector<16x2xf32>, vector<128x16xf32>, vector<2x128xf32> -> vector<2x128xf32>
    %c0_11 = arith.constant 0 : index
    %c0_12 = arith.constant 0 : index
    %c0_13 = arith.constant 0 : index
    %13 = vector.load %arg7[%c0_11, %c0_12, %c0_13] : memref<1x2x128xf32, #tpu.memory_space<vmem>>, vector<1x2x128xf32>
    %14 = vector.shape_cast %13 : vector<1x2x128xf32> to vector<2x128xf32>
    %15 = vector.shape_cast %12 : vector<2x128xf32> to vector<1x2x128xf32>
    tpu.vector_store %arg7[%c0_11, %c0_12, %c0_13], %15 {strides = array<i32>} : memref<1x2x128xf32, #tpu.memory_space<vmem>>, vector<1x2x128xf32>,
    %c0_14 = arith.constant 0 : index
    %c0_15 = arith.constant 0 : index
    %c0_16 = arith.constant 0 : index
    %16 = vector.load %arg5[%c0_14, %c0_15, %c0_16] : memref<1x16x2xf32, #tpu.memory_space<vmem>>, vector<1x16x2xf32>
    %17 = vector.shape_cast %16 : vector<1x16x2xf32> to vector<16x2xf32>
    %cst_17 = arith.constant dense<0.000000e+00> : vector<128x2xf32>
    %18 = tpu.matmul %5, %17, %cst_17 {dimension_numbers = #tpu.dot_dimension_numbers<[1], [0], [0], [1], [0, 0, 1, 1], [], []>} : vector<128x16xf32>, vector<16x2xf32>, vector<128x2xf32> -> vector<128x2xf32>
    %c0_18 = arith.constant 0 : index
    %c0_19 = arith.constant 0 : index
    %c0_20 = arith.constant 0 : index
    %19 = vector.load %arg8[%c0_18, %c0_19, %c0_20] : memref<1x128x2xf32, #tpu.memory_space<vmem>>, vector<1x128x2xf32>
    %20 = vector.shape_cast %19 : vector<1x128x2xf32> to vector<128x2xf32>
    %21 = vector.shape_cast %18 : vector<128x2xf32> to vector<1x128x2xf32>
    tpu.vector_store %arg8[%c0_18, %c0_19, %c0_20], %21 {strides = array<i32>} : memref<1x128x2xf32, #tpu.memory_space<vmem>>, vector<1x128x2xf32>,
    return
  }
  func.func @transform_0(%arg0: i32, %arg1: i32) -> (i32, i32) {
    %c0_i32 = arith.constant 0 : i32
    %c0_i32_0 = arith.constant 0 : i32
    return %arg1, %c0_i32 : i32, i32
  }
  func.func @transform_1(%arg0: i32, %arg1: i32) -> (i32, i32, i32) {
    %c0_i32 = arith.constant 0 : i32
    %c0_i32_0 = arith.constant 0 : i32
    %c0_i32_1 = arith.constant 0 : i32
    return %arg0, %c0_i32, %c0_i32_0 : i32, i32, i32
  }
  func.func @transform_2(%arg0: i32, %arg1: i32) -> (i32, i32, i32) {
    %c0_i32 = arith.constant 0 : i32
    %c0_i32_0 = arith.constant 0 : i32
    %c0_i32_1 = arith.constant 0 : i32
    return %arg0, %c0_i32, %c0_i32_0 : i32, i32, i32
  }
  func.func @transform_3(%arg0: i32, %arg1: i32) -> (i32, i32, i32) {
    %c0_i32 = arith.constant 0 : i32
    %c0_i32_0 = arith.constant 0 : i32
    %c0_i32_1 = arith.constant 0 : i32
    return %arg0, %c0_i32, %c0_i32_0 : i32, i32, i32
  }
  func.func @transform_4(%arg0: i32, %arg1: i32) -> (i32, i32, i32) {
    %c0_i32 = arith.constant 0 : i32
    %c0_i32_0 = arith.constant 0 : i32
    return %arg0, %arg1, %c0_i32 : i32, i32, i32
  }
  func.func @transform_5(%arg0: i32, %arg1: i32) -> (i32, i32, i32) {
    %c0_i32 = arith.constant 0 : i32
    %c0_i32_0 = arith.constant 0 : i32
    return %arg0, %c0_i32, %arg1 : i32, i32, i32
  }
  func.func @transform_6(%arg0: i32, %arg1: i32) -> (i32, i32, i32) {
    %c0_i32 = arith.constant 0 : i32
    %c0_i32_0 = arith.constant 0 : i32
    return %arg0, %arg1, %c0_i32 : i32, i32, i32
  }
}

</mosaic_0001>

<llo_original>
// kernel: tpu_custom_call.1
$region0: #{tpu_custom_call.1}
  #allocation0 [shape = 'u32[]', space=smem, size = 0x4, offset = 0x4, fixed_abs, tag = 'smem constant byte address 0x4 - core index']
  #allocation1 [shape = 'u32[144,128]{1,0:T(1,128)}', space=vmem, size = 0x12000, scoped, tag = 'internal scratch']
  %s0 = inlined_call_operand.hbm [shape: f32[384,8], index: 0, kind: input, shape index: {}]
  %s1 = inlined_call_operand.hbm [shape: f32[3,8,16], index: 1, kind: input, shape index: {}]
  %s2 = inlined_call_operand.hbm [shape: f32[3,16,2], index: 2, kind: input, shape index: {}]
  %s3 = inlined_call_operand.hbm [shape: f32[3,16,2], index: 3, kind: input, shape index: {}]
  %s4 = inlined_call_operand.hbm [shape: bf16[3,384,16], index: 4, kind: output, shape index: {0}]
  %s5 = inlined_call_operand.hbm [shape: f32[3,2,384], index: 5, kind: output, shape index: {1}]
  %s6 = inlined_call_operand.hbm [shape: f32[3,384,2], index: 6, kind: output, shape index: {2}]
  %7 = xla_tuple %s4, %s5, %s6
  %s8 = sld [smem:[#allocation0]]
  $region81: #{tpu_custom_call.1} parent=0
    _
  %s10 = ssub.s32 1, %s8
  %s11 = scalar_select 0, %s10, %s8
  $region1: #{tpu_custom_call.1} parent=0
    #allocation2 [shape = 'u8[131072]{0}', space=vmem, size = 0x20000, scoped, tag = 'input window, operand 0']
    #allocation3 [shape = 's32[2]{0}', space=sflag, size = 0x8, scoped, tag = 'scoped memory for tpu_custom_call.1']
    #allocation4 [shape = 's32[2]{0}', space=sflag, size = 0x8, scoped, tag = 'scoped memory for tpu_custom_call.1']
    #allocation5 [shape = 'u8[8192]{0}', space=vmem, size = 0x2000, scoped, tag = 'input window, operand 1']
    #allocation6 [shape = 's32[2]{0}', space=sflag, size = 0x8, scoped, tag = 'scoped memory for tpu_custom_call.1']
    #allocation7 [shape = 'u8[16384]{0}', space=vmem, size = 0x4000, scoped, tag = 'input window, operand 2']
    #allocation8 [shape = 'u8[16384]{0}', space=vmem, size = 0x4000, scoped, tag = 'input window, operand 3']
    #allocation9 [shape = 's32[2]{0}', space=sflag, size = 0x8, scoped, tag = 'scoped memory for tpu_custom_call.1']
    #allocation10 [shape = 'u8[65536]{0}', space=vmem, size = 0x10000, scoped, tag = 'output window, operand 0']
    #allocation11 [shape = 'u8[2048]{0}', space=vmem, size = 0x800, scoped, tag = 'output window, operand 1']
    #allocation12 [shape = 's32[2]{0}', space=sflag, size = 0x8, scoped, tag = 'scoped memory for tpu_custom_call.1']
    #allocation13 [shape = 'u8[131072]{0}', space=vmem, size = 0x20000, scoped, tag = 'output window, operand 2']
    %12 = vsyncpa [#allocation3], 0
    %s13 = scalar_lea.sflag [#allocation3], 1
    %14 = vsyncpa %s13, 0
    %15 = vsyncpa [#allocation6], 0
    %s16 = scalar_lea.sflag [#allocation6], 1
    %17 = vsyncpa %s16, 0
    %18 = vsyncpa [#allocation9], 0
    %s19 = scalar_lea.sflag [#allocation9], 1
    %20 = vsyncpa %s19, 0
    %21 = vsyncpa [#allocation4], 0
    %s22 = scalar_lea.sflag [#allocation4], 1
    %23 = vsyncpa %s22, 0
    %24 = vsyncpa [#allocation12], 0
    %s25 = scalar_lea.sflag [#allocation12], 1
    %26 = vsyncpa %s25, 0
    loop: start=0, step=1, limit=11
    $region2: #{tpu_custom_call.1} parent=1 // loop_pre_header
      _
    $region3: #{tpu_custom_call.1} parent=1 // loop_header
      %s28 = sphi 0, %s32
      %p29 = scmp.ge.s32.totalorder %s28, 11
      %s35 = sphi 0, %s47
      %s36 = sphi 0, %s43
      %s37 = sphi 0, %s35
      %s38 = sphi 0, %s36
      %s39 = sphi 0, %s37
      %s40 = sphi 0, %s38
      %s50 = sphi 0, %s52
      %s53 = sphi 0, %s50
      %s54 = sphi 0, %s53
      %s70 = sphi 0, %s54
      %s76 = sphi 0, %s78
      %s79 = sphi 0, %s76
      %s80 = sphi 0, %s79
      %s96 = sphi 0, %s80
      %s102 = sphi 0, %s104
      %s105 = sphi 0, %s102
      %s106 = sphi 0, %s105
      %s122 = sphi 0, %s106
      %s128 = sphi 0, %s130
      %s131 = sphi 0, %s128
      %s132 = sphi 0, %s131
      %s148 = sphi 0, %s132
      %s156 = sphi 0, %s158
      %s159 = sphi 0, %s156
      %s160 = sphi 0, %s159
      %s176 = sphi 0, %s160
      %s184 = sphi 0, %s186
      %s187 = sphi 0, %s184
      %s188 = sphi 0, %s187
      %s204 = sphi 0, %s188
      %s212 = sphi 0, %s214
      %s215 = sphi 0, %s212
      %s216 = sphi 0, %s215
      %s232 = sphi 0, %s216
    $region4: #{tpu_custom_call.1} parent=1 // loop_header_branch
      %31 = sbr.rel (%p29) target = $region8
    $region5: #{tpu_custom_call.1} parent=1 // loop_body
      %s33 = ssub.s32 %s28, 1
      %s34 = ssub.s32 %s28, 2
      %s41 = sadd.s32 1, %s36
      %p42 = scmp.ge.s32.totalorder %s41, 3
      %s43 = scalar_select %p42, 0, %s41
      %s44 = sadd.s32 1, %s35
      %s45 = scalar_select %p42, %s44, %s35
      %p46 = scmp.ge.s32.totalorder %s45, 3
      %s47 = scalar_select %p46, 0, %s45
      %s48 = ssub.s32 %s36, %s43
      %p49 = scmp.eq.s32.totalorder %s48, 0
      %s51 = sadd.s32 %s50, 1
      %s52 = scalar_select %p49, %s50, %s51
      %p55 = pneg %p49
      %p56 = scmp.eq.s32.totalorder %s28, 8
      %p57 = por %p55, %p56
      %p58 = scmp.ne.s32.totalorder %s50, %s53
      %p59 = scmp.eq.s32.totalorder %s28, 0
      %p60 = por %p58, %p59
      %p61 = scmp.ne.s32.totalorder %s50, %s53
      %p62 = scmp.eq.s32.totalorder %s33, 8
      %p63 = por %p61, %p62
      %p64 = scmp.ne.s32.totalorder %s53, %s54
      %p65 = scmp.eq.s32.totalorder %s33, 0
      %p66 = por %p64, %p65
      %p67 = scmp.ne.s32.totalorder %s53, %s54
      %p68 = scmp.eq.s32.totalorder %s34, 8
      %p69 = por %p67, %p68
      %p71 = scmp.ne.s32.totalorder %s54, %s70
      %p72 = scmp.eq.s32.totalorder %s34, 0
      %p73 = por %p71, %p72
      %s74 = ssub.s32 %s35, %s47
      %p75 = scmp.eq.s32.totalorder %s74, 0
      %s77 = sadd.s32 %s76, 1
      %s78 = scalar_select %p75, %s76, %s77
      %p81 = pneg %p75
      %p82 = scmp.eq.s32.totalorder %s28, 8
      %p83 = por %p81, %p82
      %p84 = scmp.ne.s32.totalorder %s76, %s79
      %p85 = scmp.eq.s32.totalorder %s28, 0
      %p86 = por %p84, %p85
      %p87 = scmp.ne.s32.totalorder %s76, %s79
      %p88 = scmp.eq.s32.totalorder %s33, 8
      %p89 = por %p87, %p88
      %p90 = scmp.ne.s32.totalorder %s79, %s80
      %p91 = scmp.eq.s32.totalorder %s33, 0
      %p92 = por %p90, %p91
      %p93 = scmp.ne.s32.totalorder %s79, %s80
      %p94 = scmp.eq.s32.totalorder %s34, 8
      %p95 = por %p93, %p94
      %p97 = scmp.ne.s32.totalorder %s80, %s96
      %p98 = scmp.eq.s32.totalorder %s34, 0
      %p99 = por %p97, %p98
      %s100 = ssub.s32 %s35, %s47
      %p101 = scmp.eq.s32.totalorder %s100, 0
      %s103 = sadd.s32 %s102, 1
      %s104 = scalar_select %p101, %s102, %s103
      %p107 = pneg %p101
      %p108 = scmp.eq.s32.totalorder %s28, 8
      %p109 = por %p107, %p108
      %p110 = scmp.ne.s32.totalorder %s102, %s105
      %p111 = scmp.eq.s32.totalorder %s28, 0
      %p112 = por %p110, %p111
      %p113 = scmp.ne.s32.totalorder %s102, %s105
      %p114 = scmp.eq.s32.totalorder %s33, 8
      %p115 = por %p113, %p114
      %p116 = scmp.ne.s32.totalorder %s105, %s106
      %p117 = scmp.eq.s32.totalorder %s33, 0
      %p118 = por %p116, %p117
      %p119 = scmp.ne.s32.totalorder %s105, %s106
      %p120 = scmp.eq.s32.totalorder %s34, 8
      %p121 = por %p119, %p120
      %p123 = scmp.ne.s32.totalorder %s106, %s122
      %p124 = scmp.eq.s32.totalorder %s34, 0
      %p125 = por %p123, %p124
      %s126 = ssub.s32 %s35, %s47
      %p127 = scmp.eq.s32.totalorder %s126, 0
      %s129 = sadd.s32 %s128, 1
      %s130 = scalar_select %p127, %s128, %s129
      %p133 = pneg %p127
      %p134 = scmp.eq.s32.totalorder %s28, 8
      %p135 = por %p133, %p134
      %p136 = scmp.ne.s32.totalorder %s128, %s131
      %p137 = scmp.eq.s32.totalorder %s28, 0
      %p138 = por %p136, %p137
      %p139 = scmp.ne.s32.totalorder %s128, %s131
      %p140 = scmp.eq.s32.totalorder %s33, 8
      %p141 = por %p139, %p140
      %p142 = scmp.ne.s32.totalorder %s131, %s132
      %p143 = scmp.eq.s32.totalorder %s33, 0
      %p144 = por %p142, %p143
      %p145 = scmp.ne.s32.totalorder %s131, %s132
      %p146 = scmp.eq.s32.totalorder %s34, 8
      %p147 = por %p145, %p146
      %p149 = scmp.ne.s32.totalorder %s132, %s148
      %p150 = scmp.eq.s32.totalorder %s34, 0
      %p151 = por %p149, %p150
      %s152 = ssub.s32 %s35, %s47
      %s153 = ssub.s32 %s36, %s43
      %s154 = sor.u32 %s152, %s153
      %p155 = scmp.eq.s32.totalorder %s154, 0
      %s157 = sadd.s32 %s156, 1
      %s158 = scalar_select %p155, %s156, %s157
      %p161 = pneg %p155
      %p162 = scmp.eq.s32.totalorder %s28, 8
      %p163 = por %p161, %p162
      %p164 = scmp.ne.s32.totalorder %s156, %s159
      %p165 = scmp.eq.s32.totalorder %s28, 0
      %p166 = por %p164, %p165
      %p167 = scmp.ne.s32.totalorder %s156, %s159
      %p168 = scmp.eq.s32.totalorder %s33, 8
      %p169 = por %p167, %p168
      %p170 = scmp.ne.s32.totalorder %s159, %s160
      %p171 = scmp.eq.s32.totalorder %s33, 0
      %p172 = por %p170, %p171
      %p173 = scmp.ne.s32.totalorder %s159, %s160
      %p174 = scmp.eq.s32.totalorder %s34, 8
      %p175 = por %p173, %p174
      %p177 = scmp.ne.s32.totalorder %s160, %s176
      %p178 = scmp.eq.s32.totalorder %s34, 0
      %p179 = por %p177, %p178
      %s180 = ssub.s32 %s35, %s47
      %s181 = ssub.s32 %s36, %s43
      %s182 = sor.u32 %s180, %s181
      %p183 = scmp.eq.s32.totalorder %s182, 0
      %s185 = sadd.s32 %s184, 1
      %s186 = scalar_select %p183, %s184, %s185
      %p189 = pneg %p183
      %p190 = scmp.eq.s32.totalorder %s28, 8
      %p191 = por %p189, %p190
      %p192 = scmp.ne.s32.totalorder %s184, %s187
      %p193 = scmp.eq.s32.totalorder %s28, 0
      %p194 = por %p192, %p193
      %p195 = scmp.ne.s32.totalorder %s184, %s187
      %p196 = scmp.eq.s32.totalorder %s33, 8
      %p197 = por %p195, %p196
      %p198 = scmp.ne.s32.totalorder %s187, %s188
      %p199 = scmp.eq.s32.totalorder %s33, 0
      %p200 = por %p198, %p199
      %p201 = scmp.ne.s32.totalorder %s187, %s188
      %p202 = scmp.eq.s32.totalorder %s34, 8
      %p203 = por %p201, %p202
      %p205 = scmp.ne.s32.totalorder %s188, %s204
      %p206 = scmp.eq.s32.totalorder %s34, 0
      %p207 = por %p205, %p206
      %s208 = ssub.s32 %s35, %s47
      %s209 = ssub.s32 %s36, %s43
      %s210 = sor.u32 %s208, %s209
      %p211 = scmp.eq.s32.totalorder %s210, 0
      %s213 = sadd.s32 %s212, 1
      %s214 = scalar_select %p211, %s212, %s213
      %p217 = pneg %p211
      %p218 = scmp.eq.s32.totalorder %s28, 8
      %p219 = por %p217, %p218
      %p220 = scmp.ne.s32.totalorder %s212, %s215
      %p221 = scmp.eq.s32.totalorder %s28, 0
      %p222 = por %p220, %p221
      %p223 = scmp.ne.s32.totalorder %s212, %s215
      %p224 = scmp.eq.s32.totalorder %s33, 8
      %p225 = por %p223, %p224
      %p226 = scmp.ne.s32.totalorder %s215, %s216
      %p227 = scmp.eq.s32.totalorder %s33, 0
      %p228 = por %p226, %p227
      %p229 = scmp.ne.s32.totalorder %s215, %s216
      %p230 = scmp.eq.s32.totalorder %s34, 8
      %p231 = por %p229, %p230
      %p233 = scmp.ne.s32.totalorder %s216, %s232
      %p234 = scmp.eq.s32.totalorder %s34, 0
      %p235 = por %p233, %p234
      %p236 = scmp.le.s32.totalorder 1, %s28
      %p237 = scmp.lt.s32.totalorder %s28, 10
      %p238 = pnand %p236, %p237
      %p239 = pneg %p238
      // Predicated region
      $region9: #{tpu_custom_call.1} parent=5 // pred_check
        _
      $region10: #{tpu_custom_call.1} parent=5 // pred_check_branch
        %241 = sbr.rel (%p238) target = $region12
      $region11: #{tpu_custom_call.1} parent=5 // pred_region
        %s242 = ssub.s32 %s28, 1
      $region12: #{tpu_custom_call.1} parent=5 // pred_fallthru
        _
      %p243 = scmp.lt.s32.totalorder %s28, 9
      // Predicated region
      $region13: #{tpu_custom_call.1} parent=5 // pred_check
        %p244 = pneg %p243
      $region14: #{tpu_custom_call.1} parent=5 // pred_check_branch
        %246 = sbr.rel (%p244) target = $region16
      $region15: #{tpu_custom_call.1} parent=5 // pred_region
        // Predicated region
        $region17: #{tpu_custom_call.1} parent=15 // pred_check
          %p247 = pneg %p60
        $region18: #{tpu_custom_call.1} parent=15 // pred_check_branch
          %249 = sbr.rel (%p247) target = $region20
        $region19: #{tpu_custom_call.1} parent=15 // pred_region
          %s250 = sand.u32 %s50, 1
          %s251 = scalar_lea.sflag [#allocation3], %s250
          %s252 = sand.u32 %s50, 1
          %s253 = smul.addr %s252, 128
          %s254 = scalar_lea.vmem [#allocation2], %s253
          %s255 = smul.u32 16, %s36
          %s257 = ssub.s32 2048, 2048
          %258 = vsyncadd %s251, %s257
          %s259 = smul.addr %s255, 128
          %s260 = scalar_lea.hbm %s0, %s259
          %s261 = sshll.u32 %s254, 4
          %s262 = int_to_ptr.vmem [resolvable:$true] %s261
          %267 = dma.hbm_to_vmem [thread:$0]  %s260, 2048, %s262, %s251, 128, 128, 8
        $region20: #{tpu_custom_call.1} parent=15 // pred_fallthru
          _
        // Predicated region
        $region21: #{tpu_custom_call.1} parent=15 // pred_check
          %p268 = pneg %p86
        $region22: #{tpu_custom_call.1} parent=15 // pred_check_branch
          %270 = sbr.rel (%p268) target = $region24
        $region23: #{tpu_custom_call.1} parent=15 // pred_region
          %s271 = sand.u32 %s28, 1
          %s272 = scalar_lea.sflag [#allocation6], %s271
          %s273 = sand.u32 %s76, 1
          %s274 = smul.addr %s273, 8
          %s275 = scalar_lea.vmem [#allocation5], %s274
          %s277 = ssub.s32 128, 128
          %278 = vsyncadd %s272, %s277
          %s279 = smul.addr %s35, 128
          %s280 = scalar_lea.hbm %s1, %s279
          %s282 = sshll.u32 %s275, 4
          %s283 = int_to_ptr.vmem [resolvable:$true] %s282
          %285 = dma.hbm_to_vmem [thread:$0]  %s280, 128, %s283, %s272
        $region24: #{tpu_custom_call.1} parent=15 // pred_fallthru
          _
        // Predicated region
        $region25: #{tpu_custom_call.1} parent=15 // pred_check
          %p286 = pneg %p112
        $region26: #{tpu_custom_call.1} parent=15 // pred_check_branch
          %288 = sbr.rel (%p286) target = $region28
        $region27: #{tpu_custom_call.1} parent=15 // pred_region
          %s289 = sand.u32 %s28, 1
          %s290 = scalar_lea.sflag [#allocation6], %s289
          %s291 = sand.u32 %s102, 1
          %s292 = smul.addr %s291, 16
          %s293 = scalar_lea.vmem [#allocation7], %s292
          %s295 = ssub.s32 256, 256
          %296 = vsyncadd %s290, %s295
          %s297 = smul.addr %s35, 2
          %s298 = smul.addr %s297, 128
          %s299 = scalar_lea.hbm %s2, %s298
          %s300 = sshll.u32 %s293, 4
          %s301 = int_to_ptr.vmem [resolvable:$true] %s300
          %306 = dma.hbm_to_vmem [thread:$0]  %s299, 256, %s301, %s290, 128, 128, 8
        $region28: #{tpu_custom_call.1} parent=15 // pred_fallthru
          _
        // Predicated region
        $region29: #{tpu_custom_call.1} parent=15 // pred_check
          %p307 = pneg %p138
        $region30: #{tpu_custom_call.1} parent=15 // pred_check_branch
          %309 = sbr.rel (%p307) target = $region32
        $region31: #{tpu_custom_call.1} parent=15 // pred_region
          %s310 = sand.u32 %s128, 1
          %s311 = scalar_lea.sflag [#allocation9], %s310
          %s312 = sand.u32 %s128, 1
          %s313 = smul.addr %s312, 16
          %s314 = scalar_lea.vmem [#allocation8], %s313
          %s316 = ssub.s32 256, 256
          %317 = vsyncadd %s311, %s316
          %s318 = smul.addr %s35, 2
          %s319 = smul.addr %s318, 128
          %s320 = scalar_lea.hbm %s3, %s319
          %s321 = sshll.u32 %s314, 4
          %s322 = int_to_ptr.vmem [resolvable:$true] %s321
          %327 = dma.hbm_to_vmem [thread:$0]  %s320, 256, %s322, %s311, 128, 128, 8
        $region32: #{tpu_custom_call.1} parent=15 // pred_fallthru
          _
      $region16: #{tpu_custom_call.1} parent=5 // pred_fallthru
        _
      %p328 = scmp.le.s32.totalorder 1, %s28
      %p329 = scmp.lt.s32.totalorder %s28, 10
      %p330 = pnand %p328, %p329
      %p331 = pneg %p330
      // Predicated region
      $region33: #{tpu_custom_call.1} parent=5 // pred_check
        _
      $region34: #{tpu_custom_call.1} parent=5 // pred_check_branch
        %333 = sbr.rel (%p330) target = $region36
      $region35: #{tpu_custom_call.1} parent=5 // pred_region
        %s334 = ssub.s32 %s28, 1
        %s335 = sand.u32 %s53, 1
        %s336 = scalar_lea.sflag [#allocation3], %s335
        %s337 = sand.u32 %s53, 1
        %s338 = smul.addr %s337, 128
        %s339 = scalar_lea.vmem [#allocation2], %s338
        // Predicated region
        $region37: #{tpu_custom_call.1} parent=35 // pred_check
          %p340 = pneg %p66
        $region38: #{tpu_custom_call.1} parent=35 // pred_check_branch
          %342 = sbr.rel (%p340) target = $region40
        $region39: #{tpu_custom_call.1} parent=35 // pred_region
          %343 = dma.done %s336, 2048
        $region40: #{tpu_custom_call.1} parent=35 // pred_fallthru
          _
        %s344 = sand.u32 %s33, 1
        %s345 = scalar_lea.sflag [#allocation6], %s344
        %s346 = sand.u32 %s79, 1
        %s347 = smul.addr %s346, 8
        %s348 = scalar_lea.vmem [#allocation5], %s347
        // Predicated region
        $region41: #{tpu_custom_call.1} parent=35 // pred_check
          %p349 = pneg %p92
        $region42: #{tpu_custom_call.1} parent=35 // pred_check_branch
          %351 = sbr.rel (%p349) target = $region44
        $region43: #{tpu_custom_call.1} parent=35 // pred_region
          %352 = dma.done %s345, 128
        $region44: #{tpu_custom_call.1} parent=35 // pred_fallthru
          _
        %s353 = sand.u32 %s33, 1
        %s354 = scalar_lea.sflag [#allocation6], %s353
        %s355 = sand.u32 %s105, 1
        %s356 = smul.addr %s355, 16
        %s357 = scalar_lea.vmem [#allocation7], %s356
        // Predicated region
        $region45: #{tpu_custom_call.1} parent=35 // pred_check
          %p358 = pneg %p118
        $region46: #{tpu_custom_call.1} parent=35 // pred_check_branch
          %360 = sbr.rel (%p358) target = $region48
        $region47: #{tpu_custom_call.1} parent=35 // pred_region
          %361 = dma.done %s354, 256
        $region48: #{tpu_custom_call.1} parent=35 // pred_fallthru
          _
        %s362 = sand.u32 %s131, 1
        %s363 = scalar_lea.sflag [#allocation9], %s362
        %s364 = sand.u32 %s131, 1
        %s365 = smul.addr %s364, 16
        %s366 = scalar_lea.vmem [#allocation8], %s365
        // Predicated region
        $region49: #{tpu_custom_call.1} parent=35 // pred_check
          %p367 = pneg %p144
        $region50: #{tpu_custom_call.1} parent=35 // pred_check_branch
          %369 = sbr.rel (%p367) target = $region52
        $region51: #{tpu_custom_call.1} parent=35 // pred_region
          %370 = dma.done %s363, 256
        $region52: #{tpu_custom_call.1} parent=35 // pred_fallthru
          _
        %s371 = sand.u32 %s53, 1
        %s372 = scalar_lea.sflag [#allocation3], %s371
        %s373 = sand.u32 %s53, 1
        %s374 = smul.addr %s373, 128
        %s375 = scalar_lea.vmem [#allocation2], %s374
        %p376 = pneg %p66
        %p377 = pneg %p63
        %s378 = sand.u32 %s33, 1
        %s379 = scalar_lea.sflag [#allocation6], %s378
        %s380 = sand.u32 %s79, 1
        %s381 = smul.addr %s380, 8
        %s382 = scalar_lea.vmem [#allocation5], %s381
        %p383 = pneg %p92
        %p384 = pneg %p89
        %s385 = sand.u32 %s33, 1
        %s386 = scalar_lea.sflag [#allocation6], %s385
        %s387 = sand.u32 %s105, 1
        %s388 = smul.addr %s387, 16
        %s389 = scalar_lea.vmem [#allocation7], %s388
        %p390 = pneg %p118
        %p391 = pneg %p115
        %s392 = sand.u32 %s131, 1
        %s393 = scalar_lea.sflag [#allocation9], %s392
        %s394 = sand.u32 %s131, 1
        %s395 = smul.addr %s394, 16
        %s396 = scalar_lea.vmem [#allocation8], %s395
        %p397 = pneg %p144
        %p398 = pneg %p141
        %p399 = pneg %p172
        %p400 = pneg %p169
        %s401 = sand.u32 %s159, 1
        %s402 = scalar_lea.sflag [#allocation4], %s401
        %s403 = sand.u32 %s159, 1
        %s404 = smul.addr %s403, 64
        %s405 = scalar_lea.vmem [#allocation10], %s404
        %p406 = pneg %p200
        %p407 = pneg %p197
        %s408 = sand.u32 %s33, 1
        %s409 = scalar_lea.sflag [#allocation12], %s408
        %s410 = sand.u32 %s187, 1
        %s411 = smul.addr %s410, 2
        %s412 = scalar_lea.vmem [#allocation11], %s411
        %p413 = pneg %p228
        %p414 = pneg %p225
        %s415 = sand.u32 %s33, 1
        %s416 = scalar_lea.sflag [#allocation12], %s415
        %s417 = sand.u32 %s215, 1
        %s418 = smul.addr %s417, 128
        %s419 = scalar_lea.vmem [#allocation13], %s418
        %s420 = smul.u32 16, %s38
        %s421 = smul.u32 16, %s38
        %s422 = smul.u32 16, %s38
        %v424 = vld [vmem:[%s339] sm:$0xff]
        %v425 = vld [vmem:[%s339 + $0x8] sm:$0xff]
        %v426 = vld [vmem:[%s339 + $0x10] sm:$0xff]
        %v427 = vld [vmem:[%s339 + $0x18] sm:$0xff]
        %v428 = vld [vmem:[%s339 + $0x20] sm:$0xff]
        %v429 = vld [vmem:[%s339 + $0x28] sm:$0xff]
        %v430 = vld [vmem:[%s339 + $0x30] sm:$0xff]
        %v431 = vld [vmem:[%s339 + $0x38] sm:$0xff]
        %v432 = vld [vmem:[%s339 + $0x40] sm:$0xff]
        %v433 = vld [vmem:[%s339 + $0x48] sm:$0xff]
        %v434 = vld [vmem:[%s339 + $0x50] sm:$0xff]
        %v435 = vld [vmem:[%s339 + $0x58] sm:$0xff]
        %v436 = vld [vmem:[%s339 + $0x60] sm:$0xff]
        %v437 = vld [vmem:[%s339 + $0x68] sm:$0xff]
        %v438 = vld [vmem:[%s339 + $0x70] sm:$0xff]
        %v439 = vld [vmem:[%s339 + $0x78] sm:$0xff]
        %v440 = vpack.c.bf16 %v425, %v424
        %v441 = vpack.c.bf16 %v427, %v426
        %v442 = vpack.c.bf16 %v429, %v428
        %v443 = vpack.c.bf16 %v431, %v430
        %v444 = vpack.c.bf16 %v433, %v432
        %v445 = vpack.c.bf16 %v435, %v434
        %v446 = vpack.c.bf16 %v437, %v436
        %v447 = vpack.c.bf16 %v439, %v438
        %v448 = vld [vmem:[%s348] sm:$0xff]
        %v449 = vpack.c.bf16 %v448, %v448
        %vm450 = vcmask 64512
        %v452 = vsel %vm450, %v440, 0
        %v455 = vsel %vm450, %v441, 0
        %v458 = vsel %vm450, %v442, 0
        %v461 = vsel %vm450, %v443, 0
        %v464 = vsel %vm450, %v444, 0
        %v467 = vsel %vm450, %v445, 0
        %v470 = vsel %vm450, %v446, 0
        %v473 = vsel %vm450, %v447, 0
        %vm475 = vcmask 1043456
        %v477 = vsel %vm475, %v449, 0
        %479 = vmatprep.subr.bf16.mxu0 0
        %480 = vmatpush1.bf16.msra.mxu0 %v477
        %481 = vmatprep.subr.bf16.mxu0 0
        %482 = vmatpush1.bf16.msra.mxu0 0
        %483 = vmatprep.subr.bf16.mxu0 0
        %484 = vmatpush1.bf16.msra.mxu0 0
        %485 = vmatprep.subr.bf16.mxu0 0
        %486 = vmatpush1.bf16.msra.mxu0 0
        %487 = vmatprep.subr.bf16.mxu0 0
        %488 = vmatpush1.bf16.msra.mxu0 0
        %489 = vmatprep.subr.bf16.mxu0 0
        %490 = vmatpush1.bf16.msra.mxu0 0
        %491 = vmatprep.subr.bf16.mxu0 0
        %492 = vmatpush1.bf16.msra.mxu0 0
        %493 = vmatprep.subr.bf16.mxu0 0
        %494 = vmatpush1.bf16.msra.mxu0 0
        %495 = vmatprep.subr.bf16.mxu0 0
        %496 = vmatpush1.bf16.msra.mxu0 0
        %497 = vmatprep.subr.bf16.mxu0 0
        %498 = vmatpush1.bf16.msra.mxu0 0
        %499 = vmatprep.subr.bf16.mxu0 0
        %500 = vmatpush1.bf16.msra.mxu0 0
        %501 = vmatprep.subr.bf16.mxu0 0
        %502 = vmatpush1.bf16.msra.mxu0 0
        %503 = vmatprep.subr.bf16.mxu0 0
        %504 = vmatpush1.bf16.msra.mxu0 0
        %505 = vmatprep.subr.bf16.mxu0 0
        %506 = vmatpush1.bf16.msra.mxu0 0
        %507 = vmatprep.subr.bf16.mxu0 0
        %508 = vmatpush1.bf16.msra.mxu0 0
        %509 = vmatprep.subr.bf16.mxu0 0
        %510 = vmatpush1.bf16.msra.mxu0 0
        %511 = vmatprep.mubr.bf16.mxu0 0
        %512 = vmatmul.mubr.bf16.gmra.mrb[0].mxu0 %v452
        %v513 = vpop.f32.mrb[0].mxu0
        %v514 = vadd.f32 0.0, %v513
        %v515 = vpop.f32.mrb[0].mxu0
        %v516 = vpop.f32.mrb[0].mxu0
        %v517 = vadd.f32 0.0, %v516
        %v518 = vpop.f32.mrb[0].mxu0
        %519 = vmatprep.mubr.bf16.mxu0 0
        %520 = vmatmul.mubr.bf16.gmra.mrb[0].mxu0 %v455
        %v521 = vpop.f32.mrb[0].mxu0
        %v522 = vadd.f32 0.0, %v521
        %v523 = vpop.f32.mrb[0].mxu0
        %v524 = vpop.f32.mrb[0].mxu0
        %v525 = vadd.f32 0.0, %v524
        %v526 = vpop.f32.mrb[0].mxu0
        %527 = vmatprep.mubr.bf16.mxu0 0
        %528 = vmatmul.mubr.bf16.gmra.mrb[0].mxu0 %v458
        %v529 = vpop.f32.mrb[0].mxu0
        %v530 = vadd.f32 0.0, %v529
        %v531 = vpop.f32.mrb[0].mxu0
        %v532 = vpop.f32.mrb[0].mxu0
        %v533 = vadd.f32 0.0, %v532
        %v534 = vpop.f32.mrb[0].mxu0
        %535 = vmatprep.mubr.bf16.mxu0 0
        %536 = vmatmul.mubr.bf16.gmra.mrb[0].mxu0 %v461
        %v537 = vpop.f32.mrb[0].mxu0
        %v538 = vadd.f32 0.0, %v537
        %v539 = vpop.f32.mrb[0].mxu0
        %v540 = vpop.f32.mrb[0].mxu0
        %v541 = vadd.f32 0.0, %v540
        %v542 = vpop.f32.mrb[0].mxu0
        %543 = vmatprep.mubr.bf16.mxu0 0
        %544 = vmatmul.mubr.bf16.gmra.mrb[0].mxu0 %v464
        %v545 = vpop.f32.mrb[0].mxu0
        %v546 = vadd.f32 0.0, %v545
        %v547 = vpop.f32.mrb[0].mxu0
        %v548 = vpop.f32.mrb[0].mxu0
        %v549 = vadd.f32 0.0, %v548
        %v550 = vpop.f32.mrb[0].mxu0
        %551 = vmatprep.mubr.bf16.mxu0 0
        %552 = vmatmul.mubr.bf16.gmra.mrb[0].mxu0 %v467
        %v553 = vpop.f32.mrb[0].mxu0
        %v554 = vadd.f32 0.0, %v553
        %v555 = vpop.f32.mrb[0].mxu0
        %v556 = vpop.f32.mrb[0].mxu0
        %v557 = vadd.f32 0.0, %v556
        %v558 = vpop.f32.mrb[0].mxu0
        %559 = vmatprep.mubr.bf16.mxu0 0
        %560 = vmatmul.mubr.bf16.gmra.mrb[0].mxu0 %v470
        %v561 = vpop.f32.mrb[0].mxu0
        %v562 = vadd.f32 0.0, %v561
        %v563 = vpop.f32.mrb[0].mxu0
        %v564 = vpop.f32.mrb[0].mxu0
        %v565 = vadd.f32 0.0, %v564
        %v566 = vpop.f32.mrb[0].mxu0
        %567 = vmatprep.mubr.bf16.mxu0 0
        %568 = vmatmul.mubr.bf16.gmra.mrb[0].mxu0 %v473
        %v569 = vpop.f32.mrb[0].mxu0
        %v570 = vadd.f32 0.0, %v569
        %v571 = vpop.f32.mrb[0].mxu0
        %v572 = vpop.f32.mrb[0].mxu0
        %v573 = vadd.f32 0.0, %v572
        %v574 = vpop.f32.mrb[0].mxu0
        %575 = vdwg.mxu0
        %v576 = vpack.c.bf16 %v517, %v514
        %v577 = vpack.c.bf16 %v525, %v522
        %v578 = vpack.c.bf16 %v533, %v530
        %v579 = vpack.c.bf16 %v541, %v538
        %v580 = vpack.c.bf16 %v549, %v546
        %v581 = vpack.c.bf16 %v557, %v554
        %v582 = vpack.c.bf16 %v565, %v562
        %v583 = vpack.c.bf16 %v573, %v570
        %v592 = vunpack.c.l.b16 %v576
        %v593 = vunpack.c.h.b16 %v576
        %v594 = vunpack.c.l.b16 %v577
        %v595 = vunpack.c.h.b16 %v577
        %v596 = vunpack.c.l.b16 %v578
        %v597 = vunpack.c.h.b16 %v578
        %v598 = vunpack.c.l.b16 %v579
        %v599 = vunpack.c.h.b16 %v579
        %v600 = vunpack.c.l.b16 %v580
        %v601 = vunpack.c.h.b16 %v580
        %v602 = vunpack.c.l.b16 %v581
        %v603 = vunpack.c.h.b16 %v581
        %v604 = vunpack.c.l.b16 %v582
        %v605 = vunpack.c.h.b16 %v582
        %v606 = vunpack.c.l.b16 %v583
        %v607 = vunpack.c.h.b16 %v583
        %v608 = vpack.c.b16 %v592, %v592
        %v609 = vpack.c.b16 %v593, %v593
        %v610 = vpack.c.b16 %v594, %v594
        %v611 = vpack.c.b16 %v595, %v595
        %v612 = vpack.c.b16 %v596, %v596
        %v613 = vpack.c.b16 %v597, %v597
        %v614 = vpack.c.b16 %v598, %v598
        %v615 = vpack.c.b16 %v599, %v599
        %v616 = vpack.c.b16 %v600, %v600
        %v617 = vpack.c.b16 %v601, %v601
        %v618 = vpack.c.b16 %v602, %v602
        %v619 = vpack.c.b16 %v603, %v603
        %v620 = vpack.c.b16 %v604, %v604
        %v621 = vpack.c.b16 %v605, %v605
        %v622 = vpack.c.b16 %v606, %v606
        %v623 = vpack.c.b16 %v607, %v607
        %vm640 = vcmask 125952
        %641 = vst.msk [vmem:[%s405] sm:$0xf] %vm640, %v608
        %642 = vst.msk [vmem:[%s405 + $0x4] sm:$0xf] %vm640, %v609
        %643 = vst.msk [vmem:[%s405 + $0x8] sm:$0xf] %vm640, %v610
        %644 = vst.msk [vmem:[%s405 + $0xc] sm:$0xf] %vm640, %v611
        %645 = vst.msk [vmem:[%s405 + $0x10] sm:$0xf] %vm640, %v612
        %646 = vst.msk [vmem:[%s405 + $0x14] sm:$0xf] %vm640, %v613
        %647 = vst.msk [vmem:[%s405 + $0x18] sm:$0xf] %vm640, %v614
        %648 = vst.msk [vmem:[%s405 + $0x1c] sm:$0xf] %vm640, %v615
        %649 = vst.msk [vmem:[%s405 + $0x20] sm:$0xf] %vm640, %v616
        %650 = vst.msk [vmem:[%s405 + $0x24] sm:$0xf] %vm640, %v617
        %651 = vst.msk [vmem:[%s405 + $0x28] sm:$0xf] %vm640, %v618
        %652 = vst.msk [vmem:[%s405 + $0x2c] sm:$0xf] %vm640, %v619
        %653 = vst.msk [vmem:[%s405 + $0x30] sm:$0xf] %vm640, %v620
        %654 = vst.msk [vmem:[%s405 + $0x34] sm:$0xf] %vm640, %v621
        %655 = vst.msk [vmem:[%s405 + $0x38] sm:$0xf] %vm640, %v622
        %656 = vst.msk [vmem:[%s405 + $0x3c] sm:$0xf] %vm640, %v623
        %v657 = vld [vmem:[%s357] sm:$0xff]
        %v658 = vld [vmem:[%s357 + $0x8] sm:$0xff]
        %659 = vxpose.xlu0.b32.start [1/16] %v657, 128
        %660 = vxpose.xlu0.b32.cont [2/16] %v658, 128
        %661 = vxpose.xlu0.b32.cont [3/16] 0.0, 128
        %662 = vxpose.xlu0.b32.cont [4/16] 0.0, 128
        %663 = vxpose.xlu0.b32.cont [5/16] 0.0, 128
        %664 = vxpose.xlu0.b32.cont [6/16] 0.0, 128
        %665 = vxpose.xlu0.b32.cont [7/16] 0.0, 128
        %666 = vxpose.xlu0.b32.cont [8/16] 0.0, 128
        %667 = vxpose.xlu0.b32.cont [9/16] 0.0, 128
        %668 = vxpose.xlu0.b32.cont [10/16] 0.0, 128
        %669 = vxpose.xlu0.b32.cont [11/16] 0.0, 128
        %670 = vxpose.xlu0.b32.cont [12/16] 0.0, 128
        %671 = vxpose.xlu0.b32.cont [13/16] 0.0, 128
        %672 = vxpose.xlu0.b32.cont [14/16] 0.0, 128
        %673 = vxpose.xlu0.b32.cont [15/16] 0.0, 128
        %674 = vxpose.xlu0.b32.end [16/16] 0.0, 128
        %v675 = vpop.trf.xlu0
        %v676 = vpop.trf.xlu0
        %v677 = vpop.trf.xlu0
        %v678 = vpop.trf.xlu0
        %v679 = vpop.trf.xlu0
        %v680 = vpop.trf.xlu0
        %v681 = vpop.trf.xlu0
        %v682 = vpop.trf.xlu0
        %v683 = vpop.trf.xlu0
        %v684 = vpop.trf.xlu0
        %v685 = vpop.trf.xlu0
        %v686 = vpop.trf.xlu0
        %v687 = vpop.trf.xlu0
        %v688 = vpop.trf.xlu0
        %v689 = vpop.trf.xlu0
        %v690 = vpop.trf.xlu0
        %vm691 = vcmask 130048
        %v693 = vsel %vm691, %v675, 0
        %v696 = vsel %vm691, %v514, 0
        %v699 = vsel %vm691, %v517, 0
        %v702 = vsel %vm691, %v522, 0
        %v705 = vsel %vm691, %v525, 0
        %v708 = vsel %vm691, %v530, 0
        %v711 = vsel %vm691, %v533, 0
        %v714 = vsel %vm691, %v538, 0
        %v717 = vsel %vm691, %v541, 0
        %v720 = vsel %vm691, %v546, 0
        %v723 = vsel %vm691, %v549, 0
        %v726 = vsel %vm691, %v554, 0
        %v729 = vsel %vm691, %v557, 0
        %v732 = vsel %vm691, %v562, 0
        %v735 = vsel %vm691, %v565, 0
        %v738 = vsel %vm691, %v570, 0
        %v741 = vsel %vm691, %v573, 0
        %743 = vmatprep.subr.mxu0 0.0
        %744 = vmatpush1.xpose.msra.mxu0 %v696
        %745 = vmatprep.subr.mxu0 0.0
        %746 = vmatpush1.xpose.msra.mxu0 %v699
        %747 = vmatprep.subr.mxu0 0.0
        %748 = vmatpush1.xpose.msra.mxu0 %v702
        %749 = vmatprep.subr.mxu0 0.0
        %750 = vmatpush1.xpose.msra.mxu0 %v705
        %751 = vmatprep.subr.mxu0 0.0
        %752 = vmatpush1.xpose.msra.mxu0 %v708
        %753 = vmatprep.subr.mxu0 0.0
        %754 = vmatpush1.xpose.msra.mxu0 %v711
        %755 = vmatprep.subr.mxu0 0.0
        %756 = vmatpush1.xpose.msra.mxu0 %v714
        %757 = vmatprep.subr.mxu0 0.0
        %758 = vmatpush1.xpose.msra.mxu0 %v717
        %759 = vmatprep.subr.mxu0 0.0
        %760 = vmatpush1.xpose.msra.mxu0 %v720
        %761 = vmatprep.subr.mxu0 0.0
        %762 = vmatpush1.xpose.msra.mxu0 %v723
        %763 = vmatprep.subr.mxu0 0.0
        %764 = vmatpush1.xpose.msra.mxu0 %v726
        %765 = vmatprep.subr.mxu0 0.0
        %766 = vmatpush1.xpose.msra.mxu0 %v729
        %767 = vmatprep.subr.mxu0 0.0
        %768 = vmatpush1.xpose.msra.mxu0 %v732
        %769 = vmatprep.subr.mxu0 0.0
        %770 = vmatpush1.xpose.msra.mxu0 %v735
        %771 = vmatprep.subr.mxu0 0.0
        %772 = vmatpush1.xpose.msra.mxu0 %v738
        %773 = vmatprep.subr.mxu0 0.0
        %774 = vmatpush1.xpose.msra.mxu0 %v741
        %775 = vmatprep.subr.mxu0 0.0
        %776 = vmatpush1.xpose.msra.mxu0 0.0
        %777 = vmatprep.subr.mxu0 0.0
        %778 = vmatpush1.xpose.msra.mxu0 0.0
        %779 = vmatprep.subr.mxu0 0.0
        %780 = vmatpush1.xpose.msra.mxu0 0.0
        %781 = vmatprep.subr.mxu0 0.0
        %782 = vmatpush1.xpose.msra.mxu0 0.0
        %783 = vmatprep.subr.mxu0 0.0
        %784 = vmatpush1.xpose.msra.mxu0 0.0
        %785 = vmatprep.subr.mxu0 0.0
        %786 = vmatpush1.xpose.msra.mxu0 0.0
        %787 = vmatprep.subr.mxu0 0.0
        %788 = vmatpush1.xpose.msra.mxu0 0.0
        %789 = vmatprep.subr.mxu0 0.0
        %790 = vmatpush1.xpose.msra.mxu0 0.0
        %791 = vmatprep.subr.mxu0 0.0
        %792 = vmatpush1.xpose.msra.mxu0 0.0
        %793 = vmatprep.subr.mxu0 0.0
        %794 = vmatpush1.xpose.msra.mxu0 0.0
        %795 = vmatprep.subr.mxu0 0.0
        %796 = vmatpush1.xpose.msra.mxu0 0.0
        %797 = vmatprep.subr.mxu0 0.0
        %798 = vmatpush1.xpose.msra.mxu0 0.0
        %799 = vmatprep.subr.mxu0 0.0
        %800 = vmatpush1.xpose.msra.mxu0 0.0
        %801 = vmatprep.subr.mxu0 0.0
        %802 = vmatpush1.xpose.msra.mxu0 0.0
        %803 = vmatprep.subr.mxu0 0.0
        %804 = vmatpush1.xpose.msra.mxu0 0.0
        %805 = vmatprep.subr.mxu0 0.0
        %806 = vmatpush1.xpose.msra.mxu0 0.0
        %807 = vmatprep.mubr.f32.mxu0 0.0
        %808 = vmatmul.mubr.f32.gmra.mrb[0].mxu0 %v693
        %v809 = vpop.f32.mrb[0].mxu0
        %v810 = vadd.f32 0.0, %v809
        %v811 = vpop.f32.mrb[0].mxu0
        %812 = vdwg.mxu0
        %813 = vst [vmem:[%s412] sm:$0x3] %v810
        %v814 = vld [vmem:[%s366] sm:$0xff]
        %v815 = vld [vmem:[%s366 + $0x8] sm:$0xff]
        %816 = vmatprep.subr.mxu0 0.0
        %817 = vmatpush1.msra.mxu0 %v814
        %818 = vmatprep.subr.mxu0 0.0
        %819 = vmatpush1.msra.mxu0 %v815
        %820 = vmatprep.subr.mxu0 0.0
        %821 = vmatpush1.msra.mxu0 0.0
        %822 = vmatprep.subr.mxu0 0.0
        %823 = vmatpush1.msra.mxu0 0.0
        %824 = vmatprep.subr.mxu0 0.0
        %825 = vmatpush1.msra.mxu0 0.0
        %826 = vmatprep.subr.mxu0 0.0
        %827 = vmatpush1.msra.mxu0 0.0
        %828 = vmatprep.subr.mxu0 0.0
        %829 = vmatpush1.msra.mxu0 0.0
        %830 = vmatprep.subr.mxu0 0.0
        %831 = vmatpush1.msra.mxu0 0.0
        %832 = vmatprep.subr.mxu0 0.0
        %833 = vmatpush1.msra.mxu0 0.0
        %834 = vmatprep.subr.mxu0 0.0
        %835 = vmatpush1.msra.mxu0 0.0
        %836 = vmatprep.subr.mxu0 0.0
        %837 = vmatpush1.msra.mxu0 0.0
        %838 = vmatprep.subr.mxu0 0.0
        %839 = vmatpush1.msra.mxu0 0.0
        %840 = vmatprep.subr.mxu0 0.0
        %841 = vmatpush1.msra.mxu0 0.0
        %842 = vmatprep.subr.mxu0 0.0
        %843 = vmatpush1.msra.mxu0 0.0
        %844 = vmatprep.subr.mxu0 0.0
        %845 = vmatpush1.msra.mxu0 0.0
        %846 = vmatprep.subr.mxu0 0.0
        %847 = vmatpush1.msra.mxu0 0.0
        %848 = vmatprep.subr.mxu0 0.0
        %849 = vmatpush1.msra.mxu0 0.0
        %850 = vmatprep.subr.mxu0 0.0
        %851 = vmatpush1.msra.mxu0 0.0
        %852 = vmatprep.subr.mxu0 0.0
        %853 = vmatpush1.msra.mxu0 0.0
        %854 = vmatprep.subr.mxu0 0.0
        %855 = vmatpush1.msra.mxu0 0.0
        %856 = vmatprep.subr.mxu0 0.0
        %857 = vmatpush1.msra.mxu0 0.0
        %858 = vmatprep.subr.mxu0 0.0
        %859 = vmatpush1.msra.mxu0 0.0
        %860 = vmatprep.subr.mxu0 0.0
        %861 = vmatpush1.msra.mxu0 0.0
        %862 = vmatprep.subr.mxu0 0.0
        %863 = vmatpush1.msra.mxu0 0.0
        %864 = vmatprep.subr.mxu0 0.0
        %865 = vmatpush1.msra.mxu0 0.0
        %866 = vmatprep.subr.mxu0 0.0
        %867 = vmatpush1.msra.mxu0 0.0
        %868 = vmatprep.subr.mxu0 0.0
        %869 = vmatpush1.msra.mxu0 0.0
        %870 = vmatprep.subr.mxu0 0.0
        %871 = vmatpush1.msra.mxu0 0.0
        %872 = vmatprep.subr.mxu0 0.0
        %873 = vmatpush1.msra.mxu0 0.0
        %874 = vmatprep.subr.mxu0 0.0
        %875 = vmatpush1.msra.mxu0 0.0
        %876 = vmatprep.subr.mxu0 0.0
        %877 = vmatpush1.msra.mxu0 0.0
        %878 = vmatprep.subr.mxu0 0.0
        %879 = vmatpush1.msra.mxu0 0.0
        %880 = vmatprep.mubr.f32.mxu0 0.0
        %881 = vmatmul.mubr.f32.gmra.mrb[0].mxu0 %v696
        %v882 = vpop.f32.mrb[0].mxu0
        %v883 = vadd.f32 0.0, %v882
        %v884 = vpop.f32.mrb[0].mxu0
        %885 = vmatprep.mubr.f32.mxu0 0.0
        %886 = vmatmul.mubr.f32.gmra.mrb[0].mxu0 %v699
        %v887 = vpop.f32.mrb[0].mxu0
        %v888 = vadd.f32 0.0, %v887
        %v889 = vpop.f32.mrb[0].mxu0
        %890 = vmatprep.mubr.f32.mxu0 0.0
        %891 = vmatmul.mubr.f32.gmra.mrb[0].mxu0 %v702
        %v892 = vpop.f32.mrb[0].mxu0
        %v893 = vadd.f32 0.0, %v892
        %v894 = vpop.f32.mrb[0].mxu0
        %895 = vmatprep.mubr.f32.mxu0 0.0
        %896 = vmatmul.mubr.f32.gmra.mrb[0].mxu0 %v705
        %v897 = vpop.f32.mrb[0].mxu0
        %v898 = vadd.f32 0.0, %v897
        %v899 = vpop.f32.mrb[0].mxu0
        %900 = vmatprep.mubr.f32.mxu0 0.0
        %901 = vmatmul.mubr.f32.gmra.mrb[0].mxu0 %v708
        %v902 = vpop.f32.mrb[0].mxu0
        %v903 = vadd.f32 0.0, %v902
        %v904 = vpop.f32.mrb[0].mxu0
        %905 = vmatprep.mubr.f32.mxu0 0.0
        %906 = vmatmul.mubr.f32.gmra.mrb[0].mxu0 %v711
        %v907 = vpop.f32.mrb[0].mxu0
        %v908 = vadd.f32 0.0, %v907
        %v909 = vpop.f32.mrb[0].mxu0
        %910 = vmatprep.mubr.f32.mxu0 0.0
        %911 = vmatmul.mubr.f32.gmra.mrb[0].mxu0 %v714
        %v912 = vpop.f32.mrb[0].mxu0
        %v913 = vadd.f32 0.0, %v912
        %v914 = vpop.f32.mrb[0].mxu0
        %915 = vmatprep.mubr.f32.mxu0 0.0
        %916 = vmatmul.mubr.f32.gmra.mrb[0].mxu0 %v717
        %v917 = vpop.f32.mrb[0].mxu0
        %v918 = vadd.f32 0.0, %v917
        %v919 = vpop.f32.mrb[0].mxu0
        %920 = vmatprep.mubr.f32.mxu0 0.0
        %921 = vmatmul.mubr.f32.gmra.mrb[0].mxu0 %v720
        %v922 = vpop.f32.mrb[0].mxu0
        %v923 = vadd.f32 0.0, %v922
        %v924 = vpop.f32.mrb[0].mxu0
        %925 = vmatprep.mubr.f32.mxu0 0.0
        %926 = vmatmul.mubr.f32.gmra.mrb[0].mxu0 %v723
        %v927 = vpop.f32.mrb[0].mxu0
        %v928 = vadd.f32 0.0, %v927
        %v929 = vpop.f32.mrb[0].mxu0
        %930 = vmatprep.mubr.f32.mxu0 0.0
        %931 = vmatmul.mubr.f32.gmra.mrb[0].mxu0 %v726
        %v932 = vpop.f32.mrb[0].mxu0
        %v933 = vadd.f32 0.0, %v932
        %v934 = vpop.f32.mrb[0].mxu0
        %935 = vmatprep.mubr.f32.mxu0 0.0
        %936 = vmatmul.mubr.f32.gmra.mrb[0].mxu0 %v729
        %v937 = vpop.f32.mrb[0].mxu0
        %v938 = vadd.f32 0.0, %v937
        %v939 = vpop.f32.mrb[0].mxu0
        %940 = vmatprep.mubr.f32.mxu0 0.0
        %941 = vmatmul.mubr.f32.gmra.mrb[0].mxu0 %v732
        %v942 = vpop.f32.mrb[0].mxu0
        %v943 = vadd.f32 0.0, %v942
        %v944 = vpop.f32.mrb[0].mxu0
        %945 = vmatprep.mubr.f32.mxu0 0.0
        %946 = vmatmul.mubr.f32.gmra.mrb[0].mxu0 %v735
        %v947 = vpop.f32.mrb[0].mxu0
        %v948 = vadd.f32 0.0, %v947
        %v949 = vpop.f32.mrb[0].mxu0
        %950 = vmatprep.mubr.f32.mxu0 0.0
        %951 = vmatmul.mubr.f32.gmra.mrb[0].mxu0 %v738
        %v952 = vpop.f32.mrb[0].mxu0
        %v953 = vadd.f32 0.0, %v952
        %v954 = vpop.f32.mrb[0].mxu0
        %955 = vmatprep.mubr.f32.mxu0 0.0
        %956 = vmatmul.mubr.f32.gmra.mrb[0].mxu0 %v741
        %v957 = vpop.f32.mrb[0].mxu0
        %v958 = vadd.f32 0.0, %v957
        %v959 = vpop.f32.mrb[0].mxu0
        %960 = vdwg.mxu0
        %vm961 = vcmask 15360
        %962 = vst.msk [vmem:[%s419] sm:$0xff] %vm961, %v883
        %963 = vst.msk [vmem:[%s419 + $0x8] sm:$0xff] %vm961, %v888
        %964 = vst.msk [vmem:[%s419 + $0x10] sm:$0xff] %vm961, %v893
        %965 = vst.msk [vmem:[%s419 + $0x18] sm:$0xff] %vm961, %v898
        %966 = vst.msk [vmem:[%s419 + $0x20] sm:$0xff] %vm961, %v903
        %967 = vst.msk [vmem:[%s419 + $0x28] sm:$0xff] %vm961, %v908
        %968 = vst.msk [vmem:[%s419 + $0x30] sm:$0xff] %vm961, %v913
        %969 = vst.msk [vmem:[%s419 + $0x38] sm:$0xff] %vm961, %v918
        %970 = vst.msk [vmem:[%s419 + $0x40] sm:$0xff] %vm961, %v923
        %971 = vst.msk [vmem:[%s419 + $0x48] sm:$0xff] %vm961, %v928
        %972 = vst.msk [vmem:[%s419 + $0x50] sm:$0xff] %vm961, %v933
        %973 = vst.msk [vmem:[%s419 + $0x58] sm:$0xff] %vm961, %v938
        %974 = vst.msk [vmem:[%s419 + $0x60] sm:$0xff] %vm961, %v943
        %975 = vst.msk [vmem:[%s419 + $0x68] sm:$0xff] %vm961, %v948
        %976 = vst.msk [vmem:[%s419 + $0x70] sm:$0xff] %vm961, %v953
        %977 = vst.msk [vmem:[%s419 + $0x78] sm:$0xff] %vm961, %v958
        %s978 = sand.u32 %s159, 1
        %s979 = scalar_lea.sflag [#allocation4], %s978
        %s980 = sand.u32 %s159, 1
        %s981 = smul.addr %s980, 64
        %s982 = scalar_lea.vmem [#allocation10], %s981
        %s983 = sand.u32 %s33, 1
        %s984 = scalar_lea.sflag [#allocation12], %s983
        %s985 = sand.u32 %s187, 1
        %s986 = smul.addr %s985, 2
        %s987 = scalar_lea.vmem [#allocation11], %s986
        %s988 = sand.u32 %s33, 1
        %s989 = scalar_lea.sflag [#allocation12], %s988
        %s990 = sand.u32 %s215, 1
        %s991 = smul.addr %s990, 128
        %s992 = scalar_lea.vmem [#allocation13], %s991
        // Predicated region
        $region53: #{tpu_custom_call.1} parent=35 // pred_check
          %p993 = pneg %p169
        $region54: #{tpu_custom_call.1} parent=35 // pred_check_branch
          %995 = sbr.rel (%p993) target = $region56
        $region55: #{tpu_custom_call.1} parent=35 // pred_region
          %s996 = smul.u32 16, %s38
          %s998 = ssub.s32 1024, 1024
          %999 = vsyncadd %s979, %s998
          %s1000 = smul.addr %s37, 48
          %s1001 = sadd.s32 %s996, %s1000
          %s1002 = smul.addr %s1001, 64
          %s1003 = scalar_lea.hbm %s4, %s1002
          %s1004 = sshll.u32 %s982, 4
          %s1005 = int_to_ptr.vmem [resolvable:$true] %s1004
          %1010 = dma.vmem_to_hbm [thread:$0]  %s1005, 1024, %s1003, %s979, 64, 64, 4
        $region56: #{tpu_custom_call.1} parent=35 // pred_fallthru
          _
        // Predicated region
        $region57: #{tpu_custom_call.1} parent=35 // pred_check
          %p1011 = pneg %p197
        $region58: #{tpu_custom_call.1} parent=35 // pred_check_branch
          %1013 = sbr.rel (%p1011) target = $region60
        $region59: #{tpu_custom_call.1} parent=35 // pred_region
          %s1015 = ssub.s32 32, 32
          %1016 = vsyncadd %s984, %s1015
          %s1017 = smul.addr %s37, 3
          %s1018 = sadd.s32 %s38, %s1017
          %s1019 = smul.addr %s1018, 32
          %s1020 = scalar_lea.hbm %s5, %s1019
          %s1022 = sshll.u32 %s987, 4
          %s1023 = int_to_ptr.vmem [resolvable:$true] %s1022
          %1025 = dma.vmem_to_hbm [thread:$0]  %s1023, 32, %s1020, %s984
        $region60: #{tpu_custom_call.1} parent=35 // pred_fallthru
          _
        // Predicated region
        $region61: #{tpu_custom_call.1} parent=35 // pred_check
          %p1026 = pneg %p225
        $region62: #{tpu_custom_call.1} parent=35 // pred_check_branch
          %1028 = sbr.rel (%p1026) target = $region64
        $region63: #{tpu_custom_call.1} parent=35 // pred_region
          %s1029 = smul.u32 16, %s38
          %s1031 = ssub.s32 2048, 2048
          %1032 = vsyncadd %s989, %s1031
          %s1033 = smul.addr %s37, 48
          %s1034 = sadd.s32 %s1029, %s1033
          %s1035 = smul.addr %s1034, 128
          %s1036 = scalar_lea.hbm %s6, %s1035
          %s1037 = sshll.u32 %s992, 4
          %s1038 = int_to_ptr.vmem [resolvable:$true] %s1037
          %1043 = dma.vmem_to_hbm [thread:$0]  %s1038, 2048, %s1036, %s989, 128, 128, 8
        $region64: #{tpu_custom_call.1} parent=35 // pred_fallthru
          _
      $region36: #{tpu_custom_call.1} parent=5 // pred_fallthru
        _
      %p1044 = scmp.le.s32.totalorder 2, %s28
      // Predicated region
      $region65: #{tpu_custom_call.1} parent=5 // pred_check
        %p1045 = pneg %p1044
      $region66: #{tpu_custom_call.1} parent=5 // pred_check_branch
        %1047 = sbr.rel (%p1045) target = $region68
      $region67: #{tpu_custom_call.1} parent=5 // pred_region
        %s1048 = ssub.s32 %s28, 2
        // Predicated region
        $region69: #{tpu_custom_call.1} parent=67 // pred_check
          %p1049 = pneg %p175
        $region70: #{tpu_custom_call.1} parent=67 // pred_check_branch
          %1051 = sbr.rel (%p1049) target = $region72
        $region71: #{tpu_custom_call.1} parent=67 // pred_region
          %s1052 = sand.u32 %s160, 1
          %s1053 = scalar_lea.sflag [#allocation4], %s1052
          %s1054 = sand.u32 %s160, 1
          %s1055 = smul.addr %s1054, 64
          %s1056 = scalar_lea.vmem [#allocation10], %s1055
          %1057 = dma.done %s1053, 1024
        $region72: #{tpu_custom_call.1} parent=67 // pred_fallthru
          _
        // Predicated region
        $region73: #{tpu_custom_call.1} parent=67 // pred_check
          %p1058 = pneg %p203
        $region74: #{tpu_custom_call.1} parent=67 // pred_check_branch
          %1060 = sbr.rel (%p1058) target = $region76
        $region75: #{tpu_custom_call.1} parent=67 // pred_region
          %s1061 = sand.u32 %s34, 1
          %s1062 = scalar_lea.sflag [#allocation12], %s1061
          %s1063 = sand.u32 %s188, 1
          %s1064 = smul.addr %s1063, 2
          %s1065 = scalar_lea.vmem [#allocation11], %s1064
          %1066 = dma.done %s1062, 32
        $region76: #{tpu_custom_call.1} parent=67 // pred_fallthru
          _
        // Predicated region
        $region77: #{tpu_custom_call.1} parent=67 // pred_check
          %p1067 = pneg %p231
        $region78: #{tpu_custom_call.1} parent=67 // pred_check_branch
          %1069 = sbr.rel (%p1067) target = $region80
        $region79: #{tpu_custom_call.1} parent=67 // pred_region
          %s1070 = sand.u32 %s34, 1
          %s1071 = scalar_lea.sflag [#allocation12], %s1070
          %s1072 = sand.u32 %s216, 1
          %s1073 = smul.addr %s1072, 128
          %s1074 = scalar_lea.vmem [#allocation13], %s1073
          %1075 = dma.done %s1071, 2048
        $region80: #{tpu_custom_call.1} parent=67 // pred_fallthru
          _
      $region68: #{tpu_custom_call.1} parent=5 // pred_fallthru
        _
    $region6: #{tpu_custom_call.1} parent=1 // loop_footer
      %s32 = sadd.s32 1, %s28
    $region7: #{tpu_custom_call.1} parent=1 // loop_footer_branch
      %27 = sbr.rel target = $region3
    $region8: #{tpu_custom_call.1} parent=1 // loop_exit
      _
    %1076 = vsyncpa [#allocation3], 1
    %s1077 = scalar_lea.sflag [#allocation3], 1
    %1078 = vsyncpa %s1077, 1
    %1079 = vsyncpa [#allocation6], 1
    %s1080 = scalar_lea.sflag [#allocation6], 1
    %1081 = vsyncpa %s1080, 1
    %1082 = vsyncpa [#allocation9], 1
    %s1083 = scalar_lea.sflag [#allocation9], 1
    %1084 = vsyncpa %s1083, 1
    %1085 = vsyncpa [#allocation4], 1
    %s1086 = scalar_lea.sflag [#allocation4], 1
    %1087 = vsyncpa %s1086, 1
    %1088 = vsyncpa [#allocation12], 1
    %s1089 = scalar_lea.sflag [#allocation12], 1
    %1090 = vsyncpa %s1089, 1

</llo_original>
